<compile_context>
chip_gen: v7x
topology: tpu7x:2x2x1
jax: 0.10.0
libtpu: 0.0.40
codegen_flags: <defaults>
</compile_context>

<pallas_src>
import math

import jax
import jax.numpy as jnp
from jax.experimental import pallas as pl
from jax.experimental.pallas import tpu as pltpu


def _round_up(x, m):
    return (x + m - 1) // m * m


def _pad2d(a, rows, cols):
    """Zero-pad a 2-D array; no-op (no copy) when already the right shape."""
    r, c = a.shape
    if (r, c) == (rows, cols):
        return a
    return jnp.pad(a, ((0, rows - r), (0, cols - c)))


def _vmem_limit_bytes():
    """Per-generation VMEM limit: ~48 MiB on v7x (64 MiB phys), ~112 MiB on v5e/v6e."""
    try:
        cap = getattr(pltpu.get_tpu_info(), "vmem_capacity_bytes", None)
    except Exception:
        cap = None
    if not cap:
        return 48 << 20  # safe on every generation
    return int(max(min(int(cap) - (16 << 20), 112 << 20), 32 << 20))


def _choose_stage2_config(n_pad, f_out_pad, budget_bytes, in_itemsize):
    """Pick (tm, tk, support_resident) for the aggregation kernel.

    Preference order (per the perf review): keep the whole support matrix
    VMEM-resident, then the largest row-panel / reduction tiles whose
    double-buffered footprint fits the budget.  tm is chosen so the parallel
    (row) grid axis has >= 2 tiles when possible (megacore sharding).
    """
    tm_cands = [t for t in (512, 256) if n_pad % t == 0 and n_pad // t >= 2]
    if not tm_cands:
        tm_cands = [256]  # n_pad == 256 (smallest padded size)
    tk_cands = [t for t in (1024, 512, 256) if n_pad % t == 0]

    def footprint(tm, tk, resident):
        adj = 2 * tm * tk * in_itemsize                       # double-buffered
        sup = (2 * n_pad * f_out_pad * in_itemsize if resident
               else 2 * tk * f_out_pad * in_itemsize)
        bia = 2 * f_out_pad * 4
        out = 2 * tm * f_out_pad * 4                          # f32 output tile
        acc = tm * f_out_pad * 4                              # f32 accumulator
        return adj + sup + bia + out + acc

    for resident in (True, False):
        for tm in tm_cands:
            for tk in tk_cands:
                if footprint(tm, tk, resident) <= budget_bytes:
                    return tm, tk, resident
    # TODO(synk): extremely wide layers (f_out_pad >~ 8K) would need an extra
    # output-column grid axis; fall back to the smallest streamed config.
    return tm_cands[-1], tk_cands[-1], False


def _block_sparse_meta(adj_p, tm, tk):
    """Compact per-row-panel lists of nonzero adj k-blocks (scalar prefetch).

    TODO(synk): for a static graph this should be computed once by the caller
    and reused across layers / training steps; recomputed per call here.
    """
    n_pad = adj_p.shape[0]
    num_i, num_k = n_pad // tm, adj_p.shape[1] // tk
    blocks = adj_p.reshape(num_i, tm, num_k, tk)
    nz = jnp.any(blocks != 0, axis=(1, 3))                       # (num_i, num_k)
    knnz = jnp.sum(nz, axis=1).astype(jnp.int32)                 # (num_i,)
    # Nonzero block indices first (ascending k), zero blocks after.
    order = jnp.argsort(jnp.where(nz, 0, 1), axis=1, stable=True).astype(jnp.int32)
    # Pad the tail with the last valid index: the adj index_map then repeats
    # the previous block, so Pallas issues no DMA for the skipped steps.
    pos = jnp.arange(num_k, dtype=jnp.int32)[None, :]
    last = jnp.maximum(knnz - 1, 0)[:, None]
    kidx = jnp.take_along_axis(order, jnp.minimum(pos, last), axis=1)
    return kidx.astype(jnp.int32), knnz


def _make_aggregate_kernel(support_resident):
    def kernel(kidx_ref, knnz_ref, adj_ref, s_ref, b_ref, o_ref, acc_ref):
        i = pl.program_id(0)
        k = pl.program_id(1)
        nnz = knnz_ref[i]                    # nonzero adj k-blocks in row panel i

        @pl.when(k == 0)
        def _init():
            # Bias folded into the f32 accumulator init (saves the finalize add).
            acc_ref[...] = jnp.broadcast_to(b_ref[...], acc_ref.shape)

        @pl.when(k < nnz)                    # skip MXU work for all-zero adj tiles
        def _accumulate():
            if support_resident:
                s_tile = s_ref[kidx_ref[i, k]]       # (tk, f_out_pad), VMEM-resident
            else:
                s_tile = s_ref[...]                  # streamed (tk, f_out_pad) tile
            acc_ref[...] += jnp.dot(adj_ref[...], s_tile,
                                    preferred_element_type=jnp.float32)

        # Store on the last nonzero k step (or at k == 0 when the whole adj row
        # panel is zero, in which case the output row is just the bias).
        @pl.when(k == jnp.maximum(nnz - 1, 0))
        def _finalize():
            o_ref[...] = acc_ref[...].astype(o_ref.dtype)

    return kernel


def graph_convolution(x, adj, weight, bias=None, *, compute_dtype=jnp.bfloat16):
    """output = adj @ (x @ weight) + bias  (f32 result; bf16 MXU inputs by default)."""
    n, f_in = x.shape
    f_out = weight.shape[1]
    assert adj.shape == (n, n), adj.shape
    in_itemsize = jnp.dtype(compute_dtype).itemsize

    # ---- Stage 1: support = X @ W (tiny; left to XLA per the perf review) ----
    support = jnp.dot(x.astype(compute_dtype), weight.astype(compute_dtype),
                      preferred_element_type=jnp.float32).astype(compute_dtype)

    # ---- Lean, lane-dense padding (skipped entirely when already aligned) ----
    n_pad = _round_up(n, 256)
    f_out_pad = _round_up(f_out, 128)
    adj_p = _pad2d(adj.astype(compute_dtype), n_pad, n_pad)
    sup_p = _pad2d(support, n_pad, f_out_pad)
    if bias is None:
        bias = jnp.zeros((f_out,), jnp.float32)
    b_p = _pad2d(bias.astype(jnp.float32).reshape(1, f_out), 1, f_out_pad)

    # ---- Tile / residency selection against the actual VMEM capacity ----
    vmem_limit = _vmem_limit_bytes()
    tm, tk, resident = _choose_stage2_config(
        n_pad, f_out_pad, vmem_limit - (8 << 20), in_itemsize)
    num_i, num_k = n_pad // tm, n_pad // tk

    # ---- Block-sparse metadata (scalar-prefetched into SMEM) ----
    kidx, knnz = _block_sparse_meta(adj_p, tm, tk)

    if resident:
        # Whole support lives in VMEM; kernel slices the k-block by leading index.
        sup_arg = sup_p.reshape(num_k, tk, f_out_pad)
        sup_spec = pl.BlockSpec((num_k, tk, f_out_pad),
                                lambda i, k, ki, nz: (0, 0, 0))   # fetched once
    else:
        sup_arg = sup_p
        sup_spec = pl.BlockSpec((tk, f_out_pad),
                                lambda i, k, ki, nz: (ki[i, k], 0))

    sup_reads = 1 if resident else num_i
    cost = pl.CostEstimate(
        flops=2 * n_pad * n_pad * f_out_pad,
        transcendentals=0,
        bytes_accessed=int(n_pad * n_pad * in_itemsize                 # adj, read once
                           + sup_reads * n_pad * f_out_pad * in_itemsize
                           + f_out_pad * 4
                           + n_pad * f_out_pad * 4),                   # f32 output
    )

    out_pad = pl.pallas_call(
        _make_aggregate_kernel(resident),
        out_shape=jax.ShapeDtypeStruct((n_pad, f_out_pad), jnp.float32),
        grid_spec=pltpu.PrefetchScalarGridSpec(
            num_scalar_prefetch=2,
            grid=(num_i, num_k),                      # reduction axis last
            in_specs=[
                pl.BlockSpec((tm, tk), lambda i, k, ki, nz: (i, ki[i, k])),   # adj
                sup_spec,                                                      # support
                pl.BlockSpec((1, f_out_pad), lambda i, k, ki, nz: (0, 0)),     # bias
            ],
            out_specs=pl.BlockSpec((tm, f_out_pad), lambda i, k, ki, nz: (i, 0)),
            scratch_shapes=[pltpu.VMEM((tm, f_out_pad), jnp.float32)],
        ),
        compiler_params=pltpu.CompilerParams(
            dimension_semantics=("parallel", "arbitrary"),
            vmem_limit_bytes=vmem_limit,
        ),
        cost_estimate=cost,
    )(kidx, knnz, adj_p, sup_arg, b_p)

    return out_pad[:n, :f_out]


def init_params(key, in_features, out_features):
    """Deterministic re-implementation of GraphConvolution.reset_parameters."""
    stdv = 1.0 / math.sqrt(out_features)
    kw, kb = jax.random.split(key)
    weight = jax.random.uniform(kw, (in_features, out_features), jnp.float32,
                                minval=-stdv, maxval=stdv)
    bias = jax.random.uniform(kb, (out_features,), jnp.float32,
                              minval=-stdv, maxval=stdv)
    return weight, bias


def _make_inputs(key, n, f_in, f_out, band=None):
    k_x, k_adj, k_p = jax.random.split(key, 3)
    x = jax.random.normal(k_x, (n, f_in), jnp.float32)
    a_raw = (jax.random.uniform(k_adj, (n, n)) > 0.7).astype(jnp.float32)
    if band is not None:                   # banded graph -> some all-zero adj blocks
        idx = jnp.arange(n)
        a_raw = a_raw * (jnp.abs(idx[:, None] - idx[None, :]) <= band)
    a_sym = jnp.maximum(a_raw, a_raw.T) + jnp.eye(n, dtype=jnp.float32)
    adj = a_sym / jnp.sum(a_sym, axis=1, keepdims=True)       # row-normalized
    weight, bias = init_params(k_p, f_in, f_out)
    return x, adj, weight, bias


def _check(x, adj, weight, bias):
    out = graph_convolution(x, adj, weight, bias)
    jax.block_until_ready(out)
    ref = adj @ (x @ weight) + bias[None, :]
    assert out.shape == ref.shape, (out.shape, ref.shape)
    err = float(jnp.max(jnp.abs(out - ref)))
    # bf16 inputs + f32 accumulation: error stays at input-rounding level.
    assert jnp.allclose(out, ref, atol=2e-2, rtol=2e-2), err
    return err


if __name__ == "__main__":
    key = jax.random.PRNGKey(0)
    k1, k2 = jax.random.split(key)

    # Small demo shape consistent with the module (N nodes, in -> out features).
    _check(*_make_inputs(k1, n=16, f_in=8, f_out=32))
    # Multi-tile case with unaligned dims and all-zero adjacency blocks, to
    # exercise padding, the k reduction and the block-sparse skip path.
    _check(*_make_inputs(k2, n=600, f_in=24, f_out=96, band=96))

    print("KERNEL_OK")
</pallas_src>

<mosaic_0001>
module attributes {stable_mosaic.version = 11 : i64} {
  func.func @kernel(%arg0: i32, %arg1: i32, %arg2: memref<1x1xi32, #tpu.memory_space<smem>>, %arg3: memref<1xi32, #tpu.memory_space<smem>>, %arg4: memref<256x256xbf16, #tpu.memory_space<vmem>>, %arg5: memref<1x256x128xbf16, #tpu.memory_space<vmem>>, %arg6: memref<1x128xf32, #tpu.memory_space<vmem>>, %arg7: memref<256x128xf32, #tpu.memory_space<vmem>>, %arg8: memref<256x128xf32, #tpu.memory_space<vmem>>) attributes {dimension_semantics = [#tpu.dimension_semantics<parallel>, #tpu.dimension_semantics<arbitrary>], iteration_bounds = array<i64: 1, 1>, scalar_prefetch = 2 : i64, scratch_operands = 1 : i64, tpu.core_type = #tpu.core_type<tc>, window_params = [{transform_indices = @transform_0, window_bounds = array<i64: 256, 256>}, {pipeline_mode = #tpu.pipeline_mode<synchronous>, transform_indices = @transform_1, window_bounds = array<i64: 1, 256, 128>}, {pipeline_mode = #tpu.pipeline_mode<synchronous>, transform_indices = @transform_2, window_bounds = array<i64: 1, 128>}, {transform_indices = @transform_3, window_bounds = array<i64: 256, 128>}]} {
    %0 = arith.index_cast %arg0 : i32 to index
    %1 = memref.load %arg3[%0] : memref<1xi32, #tpu.memory_space<smem>>
    %c0_i32 = arith.constant 0 : i32
    %2 = arith.cmpi eq, %arg1, %c0_i32 : i32
    %3 = arith.extui %2 : i1 to i32
    %c0_i32_0 = arith.constant 0 : i32
    %4 = arith.cmpi ne, %3, %c0_i32_0 : i32
    scf.if %4 {
      %c0 = arith.constant 0 : index
      %c0_4 = arith.constant 0 : index
      %13 = vector.load %arg6[%c0, %c0_4] : memref<1x128xf32, #tpu.memory_space<vmem>>, vector<1x128xf32>
      %14 = vector.shape_cast %13 : vector<1x128xf32> to vector<1x128xf32>
      %15 = vector.broadcast %14 : vector<1x128xf32> to vector<256x128xf32>
      %c0_5 = arith.constant 0 : index
      %c0_6 = arith.constant 0 : index
      %16 = vector.load %arg8[%c0_5, %c0_6] : memref<256x128xf32, #tpu.memory_space<vmem>>, vector<256x128xf32>
      tpu.vector_store %arg8[%c0_5, %c0_6], %15 {strides = array<i32>} : memref<256x128xf32, #tpu.memory_space<vmem>>, vector<256x128xf32>,
    } else {
    }
    %5 = arith.cmpi slt, %arg1, %1 : i32
    %6 = arith.extui %5 : i1 to i32
    %c0_i32_1 = arith.constant 0 : i32
    %7 = arith.cmpi ne, %6, %c0_i32_1 : i32
    scf.if %7 {
      %13 = arith.index_cast %arg0 : i32 to index
      %14 = arith.index_cast %arg1 : i32 to index
      %15 = memref.load %arg2[%13, %14] : memref<1x1xi32, #tpu.memory_space<smem>>
      %16 = arith.index_cast %15 : i32 to index
      %c0 = arith.constant 0 : index
      %c0_4 = arith.constant 0 : index
      %17 = vector.load %arg5[%16, %c0, %c0_4] : memref<1x256x128xbf16, #tpu.memory_space<vmem>>, vector<1x256x128xbf16>
      %18 = vector.shape_cast %17 : vector<1x256x128xbf16> to vector<256x128xbf16>
      %c0_5 = arith.constant 0 : index
      %c0_6 = arith.constant 0 : index
      %19 = vector.load %arg8[%c0_5, %c0_6] : memref<256x128xf32, #tpu.memory_space<vmem>>, vector<256x128xf32>
      %c0_7 = arith.constant 0 : index
      %c0_8 = arith.constant 0 : index
      %20 = vector.load %arg4[%c0_7, %c0_8] : memref<256x256xbf16, #tpu.memory_space<vmem>>, vector<256x256xbf16>
      %cst = arith.constant dense<0.000000e+00> : vector<256x128xf32>
      %21 = tpu.matmul %20, %18, %cst {dimension_numbers = #tpu.dot_dimension_numbers<[1], [0], [0], [1], [0, 0, 1, 1], [], []>} : vector<256x256xbf16>, vector<256x128xbf16>, vector<256x128xf32> -> vector<256x128xf32>
      %22 = arith.addf %19, %21 : vector<256x128xf32>
      %c0_9 = arith.constant 0 : index
      %c0_10 = arith.constant 0 : index
      %23 = vector.load %arg8[%c0_9, %c0_10] : memref<256x128xf32, #tpu.memory_space<vmem>>, vector<256x128xf32>
      tpu.vector_store %arg8[%c0_9, %c0_10], %22 {strides = array<i32>} : memref<256x128xf32, #tpu.memory_space<vmem>>, vector<256x128xf32>,
    } else {
    }
    %c1_i32 = arith.constant 1 : i32
    %8 = arith.subi %1, %c1_i32 : i32
    %c0_i32_2 = arith.constant 0 : i32
    %9 = arith.maxsi %8, %c0_i32_2 : i32
    %10 = arith.cmpi eq, %arg1, %9 : i32
    %11 = arith.extui %10 : i1 to i32
    %c0_i32_3 = arith.constant 0 : i32
    %12 = arith.cmpi ne, %11, %c0_i32_3 : i32
    scf.if %12 {
      %c0 = arith.constant 0 : index
      %c0_4 = arith.constant 0 : index
      %13 = vector.load %arg8[%c0, %c0_4] : memref<256x128xf32, #tpu.memory_space<vmem>>, vector<256x128xf32>
      %c0_5 = arith.constant 0 : index
      %c0_6 = arith.constant 0 : index
      %14 = vector.load %arg7[%c0_5, %c0_6] : memref<256x128xf32, #tpu.memory_space<vmem>>, vector<256x128xf32>
      tpu.vector_store %arg7[%c0_5, %c0_6], %13 {strides = array<i32>} : memref<256x128xf32, #tpu.memory_space<vmem>>, vector<256x128xf32>,
    } else {
    }
    return
  }
  func.func @transform_0(%arg0: i32, %arg1: i32, %arg2: memref<1x1xi32, #tpu.memory_space<smem>>, %arg3: memref<1xi32, #tpu.memory_space<smem>>) -> (i32, i32) {
    %0 = arith.index_cast %arg0 : i32 to index
    %1 = arith.index_cast %arg1 : i32 to index
    %2 = memref.load %arg2[%0, %1] : memref<1x1xi32, #tpu.memory_space<smem>>
    %c0_i32 = arith.constant 0 : i32
    return %arg0, %2 : i32, i32
  }
  func.func @transform_1(%arg0: i32, %arg1: i32, %arg2: memref<1x1xi32, #tpu.memory_space<smem>>, %arg3: memref<1xi32, #tpu.memory_space<smem>>) -> (i32, i32, i32) {
    %c0_i32 = arith.constant 0 : i32
    %c0_i32_0 = arith.constant 0 : i32
    %c0_i32_1 = arith.constant 0 : i32
    %c0_i32_2 = arith.constant 0 : i32
    return %c0_i32, %c0_i32_0, %c0_i32_1 : i32, i32, i32
  }
  func.func @transform_2(%arg0: i32, %arg1: i32, %arg2: memref<1x1xi32, #tpu.memory_space<smem>>, %arg3: memref<1xi32, #tpu.memory_space<smem>>) -> (i32, i32) {
    %c0_i32 = arith.constant 0 : i32
    %c0_i32_0 = arith.constant 0 : i32
    %c0_i32_1 = arith.constant 0 : i32
    return %c0_i32, %c0_i32_0 : i32, i32
  }
  func.func @transform_3(%arg0: i32, %arg1: i32, %arg2: memref<1x1xi32, #tpu.memory_space<smem>>, %arg3: memref<1xi32, #tpu.memory_space<smem>>) -> (i32, i32) {
    %c0_i32 = arith.constant 0 : i32
    %c0_i32_0 = arith.constant 0 : i32
    return %arg0, %c0_i32 : i32, i32
  }
}

</mosaic_0001>

<llo_original>
// kernel: tpu_custom_call.1
$region0: #{tpu_custom_call.1}
  #allocation0 [shape = 'u32[]', space=smem, size = 0x4, offset = 0x4, fixed_abs, tag = 'smem constant byte address 0x4 - core index']
  #allocation1 [shape = 'u32[144,128]{1,0:T(1,128)}', space=vmem, size = 0x12000, scoped, tag = 'internal scratch']
  #allocation2 [shape = 'f32[256,128]{1,0:T(8,128)}', space=vmem, size = 0x20000, scoped, tag = 'scratch operand']
  #allocation3 [shape = 's32[1]{0}', space=sflag, size = 0x4, scoped, tag = 'scoped memory for tpu_custom_call.1']
  #allocation4 [shape = 's32[1,1]{1,0:T(1,128)S(6)}', space=smem, size = 0x200, scoped, tag = 'prefetched SMEM operand 0']
  #allocation5 [shape = 's32[1]{0:T(128)S(6)}', space=smem, size = 0x200, scoped, tag = 'prefetched SMEM operand 1']
  %s0 = inlined_call_operand.<no memory space> [shape: s32[1,1], index: 0, kind: input, shape index: {}]
  %s1 = inlined_call_operand.<no memory space> [shape: s32[1], index: 1, kind: input, shape index: {}]
  %s2 = inlined_call_operand.hbm [shape: bf16[256,256], index: 2, kind: input, shape index: {}]
  %s3 = inlined_call_operand.hbm [shape: bf16[1,256,128], index: 3, kind: input, shape index: {}]
  %s4 = inlined_call_operand.vmem [shape: f32[1,128], index: 4, kind: input, shape index: {}]
  %s5 = inlined_call_operand.hbm [shape: f32[256,128], index: 5, kind: output, shape index: {}]
  %s6 = sld [smem:[#allocation0]]
  $region42: #{tpu_custom_call.1} parent=0
    _
  %s8 = ssub.s32 1, %s6
  %s9 = scalar_select 0, %s8, %s6
  %10 = sst [smem:[#allocation4]] %s0
  %11 = sst [smem:[#allocation5]] %s1
  $region1: #{tpu_custom_call.1} parent=0
    #allocation6 [shape = 'u8[131072]{0}', space=vmem, size = 0x20000, scoped, tag = 'input window, operand 2, single buffered']
    #allocation7 [shape = 's32[1]{0}', space=sflag, size = 0x4, scoped, tag = 'scoped memory for tpu_custom_call.1']
    #allocation8 [shape = 's32[1]{0}', space=sflag, size = 0x4, scoped, tag = 'scoped memory for tpu_custom_call.1']
    #allocation9 [shape = 'u8[65536]{0}', space=vmem, size = 0x10000, scoped, tag = 'input window, operand 3, single buffered']
    #allocation10 [shape = 's32[1]{0}', space=sflag, size = 0x4, scoped, tag = 'scoped memory for tpu_custom_call.1']
    #allocation11 [shape = 'u8[131072]{0}', space=vmem, size = 0x20000, scoped, tag = 'output window, operand 0, single buffered']
    %12 = vsyncpa [#allocation7], 0
    %13 = vsyncpa [#allocation10], 0
    %14 = vsyncpa [#allocation8], 0
    // Predicated region
    $region2: #{tpu_custom_call.1} parent=1 // pred_check
      _
    $region3: #{tpu_custom_call.1} parent=1 // pred_check_branch
      %16 = sbr.rel (0) target = $region5
    $region4: #{tpu_custom_call.1} parent=1 // pred_region
      %s17 = sadd.s32 0, 0
      %s18 = smul.u32 %s17, 128
      %s19 = sadd.s32 %s18, 0
      %s20 = sld [smem:[#allocation4 + %s19]]
      %s21 = smul.u32 2, %s20
      %s23 = ssub.s32 4096, 4096
      %24 = vsyncadd [#allocation7], %s23
      %s25 = smul.addr %s21, 64
      %s26 = scalar_lea.hbm %s2, %s25
      %s27 = sshll.u32 [#allocation6], 4
      %s28 = int_to_ptr.vmem [resolvable:$true] %s27
      %33 = dma.hbm_to_vmem [thread:$0]  %s26, 4096, %s28, [#allocation7], 128, 128, 8
    $region5: #{tpu_custom_call.1} parent=1 // pred_fallthru
      _
    // Predicated region
    $region6: #{tpu_custom_call.1} parent=1 // pred_check
      _
    $region7: #{tpu_custom_call.1} parent=1 // pred_check_branch
      %35 = sbr.rel (0) target = $region9
    $region8: #{tpu_custom_call.1} parent=1 // pred_region
      %s37 = ssub.s32 2048, 2048
      %38 = vsyncadd [#allocation10], %s37
      %s39 = sshll.u32 [#allocation9], 4
      %s40 = int_to_ptr.vmem [resolvable:$true] %s39
      %45 = dma.hbm_to_vmem [thread:$0]  %s3, 2048, %s40, [#allocation10], 64, 64, 4
    $region9: #{tpu_custom_call.1} parent=1 // pred_fallthru
      _
    // Predicated region
    $region10: #{tpu_custom_call.1} parent=1 // pred_check
      _
    $region11: #{tpu_custom_call.1} parent=1 // pred_check_branch
      %47 = sbr.rel (0) target = $region13
    $region12: #{tpu_custom_call.1} parent=1 // pred_region
      _
    $region13: #{tpu_custom_call.1} parent=1 // pred_fallthru
      _
    // Predicated region
    $region14: #{tpu_custom_call.1} parent=1 // pred_check
      _
    $region15: #{tpu_custom_call.1} parent=1 // pred_check_branch
      %49 = sbr.rel (0) target = $region17
    $region16: #{tpu_custom_call.1} parent=1 // pred_region
      %50 = dma.done [#allocation7], 4096
    $region17: #{tpu_custom_call.1} parent=1 // pred_fallthru
      _
    // Predicated region
    $region18: #{tpu_custom_call.1} parent=1 // pred_check
      _
    $region19: #{tpu_custom_call.1} parent=1 // pred_check_branch
      %52 = sbr.rel (0) target = $region21
    $region20: #{tpu_custom_call.1} parent=1 // pred_region
      %53 = dma.done [#allocation10], 2048
    $region21: #{tpu_custom_call.1} parent=1 // pred_fallthru
      _
    %s54 = sadd.s32 0, 0
    %s55 = smul.u32 %s54, 128
    %s56 = sadd.s32 %s55, 0
    %s57 = sld [smem:[#allocation4 + %s56]]
    %s58 = smul.u32 2, %s57
    %s60 = sld [smem:[#allocation5]]
    %p61 = scmp.eq.s32.totalorder 0, 0
    // Predicated region
    $region22: #{tpu_custom_call.1} parent=1 // pred_check
      %p62 = pneg %p61
    $region23: #{tpu_custom_call.1} parent=1 // pred_check_branch
      %64 = sbr.rel (%p62) target = $region25
    $region24: #{tpu_custom_call.1} parent=1 // pred_region
      %v65 = vld [vmem:[%s4] sm:$0x1]
      %v67 = vlaneseq
      %v68 = vshrl.u32 %v67, 7
      %v69 = vsub.s32 0, %v68
      %v70 = vrot.slane %v65, %v69
      %72 = vst [vmem:[#allocation2] sm:$0xff] %v70
      %73 = vst [vmem:[#allocation2 + $0x8] sm:$0xff] %v70
      %74 = vst [vmem:[#allocation2 + $0x10] sm:$0xff] %v70
      %75 = vst [vmem:[#allocation2 + $0x18] sm:$0xff] %v70
      %76 = vst [vmem:[#allocation2 + $0x20] sm:$0xff] %v70
      %77 = vst [vmem:[#allocation2 + $0x28] sm:$0xff] %v70
      %78 = vst [vmem:[#allocation2 + $0x30] sm:$0xff] %v70
      %79 = vst [vmem:[#allocation2 + $0x38] sm:$0xff] %v70
      %80 = vst [vmem:[#allocation2 + $0x40] sm:$0xff] %v70
      %81 = vst [vmem:[#allocation2 + $0x48] sm:$0xff] %v70
      %82 = vst [vmem:[#allocation2 + $0x50] sm:$0xff] %v70
      %83 = vst [vmem:[#allocation2 + $0x58] sm:$0xff] %v70
      %84 = vst [vmem:[#allocation2 + $0x60] sm:$0xff] %v70
      %85 = vst [vmem:[#allocation2 + $0x68] sm:$0xff] %v70
      %86 = vst [vmem:[#allocation2 + $0x70] sm:$0xff] %v70
      %87 = vst [vmem:[#allocation2 + $0x78] sm:$0xff] %v70
      %88 = vst [vmem:[#allocation2 + $0x80] sm:$0xff] %v70
      %89 = vst [vmem:[#allocation2 + $0x88] sm:$0xff] %v70
      %90 = vst [vmem:[#allocation2 + $0x90] sm:$0xff] %v70
      %91 = vst [vmem:[#allocation2 + $0x98] sm:$0xff] %v70
      %92 = vst [vmem:[#allocation2 + $0xa0] sm:$0xff] %v70
      %93 = vst [vmem:[#allocation2 + $0xa8] sm:$0xff] %v70
      %94 = vst [vmem:[#allocation2 + $0xb0] sm:$0xff] %v70
      %95 = vst [vmem:[#allocation2 + $0xb8] sm:$0xff] %v70
      %96 = vst [vmem:[#allocation2 + $0xc0] sm:$0xff] %v70
      %97 = vst [vmem:[#allocation2 + $0xc8] sm:$0xff] %v70
      %98 = vst [vmem:[#allocation2 + $0xd0] sm:$0xff] %v70
      %99 = vst [vmem:[#allocation2 + $0xd8] sm:$0xff] %v70
      %100 = vst [vmem:[#allocation2 + $0xe0] sm:$0xff] %v70
      %101 = vst [vmem:[#allocation2 + $0xe8] sm:$0xff] %v70
      %102 = vst [vmem:[#allocation2 + $0xf0] sm:$0xff] %v70
      %103 = vst [vmem:[#allocation2 + $0xf8] sm:$0xff] %v70
    $region25: #{tpu_custom_call.1} parent=1 // pred_fallthru
      _
    %p104 = scmp.lt.s32.totalorder 0, %s60
    // Predicated region
    $region26: #{tpu_custom_call.1} parent=1 // pred_check
      %p105 = pneg %p104
    $region27: #{tpu_custom_call.1} parent=1 // pred_check_branch
      %107 = sbr.rel (%p105) target = $region29
    $region28: #{tpu_custom_call.1} parent=1 // pred_region
      %s108 = sadd.s32 0, 0
      %s109 = smul.u32 %s108, 128
      %s110 = sadd.s32 %s109, 0
      %s111 = sld [smem:[#allocation4 + %s110]]
      %s112 = smul.u32 %s111, 32
      %s113 = smul.addr %s112, 4
      %s114 = scalar_lea.vmem [#allocation9], %s113
      %v115 = vld [vmem:[%s114] sm:$0xf]
      %v116 = vld [vmem:[%s114 + $0x4] sm:$0xf]
      %v117 = vld [vmem:[%s114 + $0x8] sm:$0xf]
      %v118 = vld [vmem:[%s114 + $0xc] sm:$0xf]
      %v119 = vld [vmem:[%s114 + $0x10] sm:$0xf]
      %v120 = vld [vmem:[%s114 + $0x14] sm:$0xf]
      %v121 = vld [vmem:[%s114 + $0x18] sm:$0xf]
      %v122 = vld [vmem:[%s114 + $0x1c] sm:$0xf]
      %v123 = vld [vmem:[%s114 + $0x20] sm:$0xf]
      %v124 = vld [vmem:[%s114 + $0x24] sm:$0xf]
      %v125 = vld [vmem:[%s114 + $0x28] sm:$0xf]
      %v126 = vld [vmem:[%s114 + $0x2c] sm:$0xf]
      %v127 = vld [vmem:[%s114 + $0x30] sm:$0xf]
      %v128 = vld [vmem:[%s114 + $0x34] sm:$0xf]
      %v129 = vld [vmem:[%s114 + $0x38] sm:$0xf]
      %v130 = vld [vmem:[%s114 + $0x3c] sm:$0xf]
      %v131 = vld [vmem:[%s114 + $0x40] sm:$0xf]
      %v132 = vld [vmem:[%s114 + $0x44] sm:$0xf]
      %v133 = vld [vmem:[%s114 + $0x48] sm:$0xf]
      %v134 = vld [vmem:[%s114 + $0x4c] sm:$0xf]
      %v135 = vld [vmem:[%s114 + $0x50] sm:$0xf]
      %v136 = vld [vmem:[%s114 + $0x54] sm:$0xf]
      %v137 = vld [vmem:[%s114 + $0x58] sm:$0xf]
      %v138 = vld [vmem:[%s114 + $0x5c] sm:$0xf]
      %v139 = vld [vmem:[%s114 + $0x60] sm:$0xf]
      %v140 = vld [vmem:[%s114 + $0x64] sm:$0xf]
      %v141 = vld [vmem:[%s114 + $0x68] sm:$0xf]
      %v142 = vld [vmem:[%s114 + $0x6c] sm:$0xf]
      %v143 = vld [vmem:[%s114 + $0x70] sm:$0xf]
      %v144 = vld [vmem:[%s114 + $0x74] sm:$0xf]
      %v145 = vld [vmem:[%s114 + $0x78] sm:$0xf]
      %v146 = vld [vmem:[%s114 + $0x7c] sm:$0xf]
      %v147 = vld [vmem:[#allocation2] sm:$0xff]
      %v148 = vld [vmem:[#allocation2 + $0x8] sm:$0xff]
      %v149 = vld [vmem:[#allocation2 + $0x10] sm:$0xff]
      %v150 = vld [vmem:[#allocation2 + $0x18] sm:$0xff]
      %v151 = vld [vmem:[#allocation2 + $0x20] sm:$0xff]
      %v152 = vld [vmem:[#allocation2 + $0x28] sm:$0xff]
      %v153 = vld [vmem:[#allocation2 + $0x30] sm:$0xff]
      %v154 = vld [vmem:[#allocation2 + $0x38] sm:$0xff]
      %v155 = vld [vmem:[#allocation2 + $0x40] sm:$0xff]
      %v156 = vld [vmem:[#allocation2 + $0x48] sm:$0xff]
      %v157 = vld [vmem:[#allocation2 + $0x50] sm:$0xff]
      %v158 = vld [vmem:[#allocation2 + $0x58] sm:$0xff]
      %v159 = vld [vmem:[#allocation2 + $0x60] sm:$0xff]
      %v160 = vld [vmem:[#allocation2 + $0x68] sm:$0xff]
      %v161 = vld [vmem:[#allocation2 + $0x70] sm:$0xff]
      %v162 = vld [vmem:[#allocation2 + $0x78] sm:$0xff]
      %v163 = vld [vmem:[#allocation2 + $0x80] sm:$0xff]
      %v164 = vld [vmem:[#allocation2 + $0x88] sm:$0xff]
      %v165 = vld [vmem:[#allocation2 + $0x90] sm:$0xff]
      %v166 = vld [vmem:[#allocation2 + $0x98] sm:$0xff]
      %v167 = vld [vmem:[#allocation2 + $0xa0] sm:$0xff]
      %v168 = vld [vmem:[#allocation2 + $0xa8] sm:$0xff]
      %v169 = vld [vmem:[#allocation2 + $0xb0] sm:$0xff]
      %v170 = vld [vmem:[#allocation2 + $0xb8] sm:$0xff]
      %v171 = vld [vmem:[#allocation2 + $0xc0] sm:$0xff]
      %v172 = vld [vmem:[#allocation2 + $0xc8] sm:$0xff]
      %v173 = vld [vmem:[#allocation2 + $0xd0] sm:$0xff]
      %v174 = vld [vmem:[#allocation2 + $0xd8] sm:$0xff]
      %v175 = vld [vmem:[#allocation2 + $0xe0] sm:$0xff]
      %v176 = vld [vmem:[#allocation2 + $0xe8] sm:$0xff]
      %v177 = vld [vmem:[#allocation2 + $0xf0] sm:$0xff]
      %v178 = vld [vmem:[#allocation2 + $0xf8] sm:$0xff]
      %v179 = vld [vmem:[#allocation6] sm:$0xff]
      %v180 = vld [vmem:[#allocation6 + $0x8] sm:$0xff]
      %v181 = vld [vmem:[#allocation6 + $0x10] sm:$0xff]
      %v182 = vld [vmem:[#allocation6 + $0x18] sm:$0xff]
      %v183 = vld [vmem:[#allocation6 + $0x20] sm:$0xff]
      %v184 = vld [vmem:[#allocation6 + $0x28] sm:$0xff]
      %v185 = vld [vmem:[#allocation6 + $0x30] sm:$0xff]
      %v186 = vld [vmem:[#allocation6 + $0x38] sm:$0xff]
      %v187 = vld [vmem:[#allocation6 + $0x40] sm:$0xff]
      %v188 = vld [vmem:[#allocation6 + $0x48] sm:$0xff]
      %v189 = vld [vmem:[#allocation6 + $0x50] sm:$0xff]
      %v190 = vld [vmem:[#allocation6 + $0x58] sm:$0xff]
      %v191 = vld [vmem:[#allocation6 + $0x60] sm:$0xff]
      %v192 = vld [vmem:[#allocation6 + $0x68] sm:$0xff]
      %v193 = vld [vmem:[#allocation6 + $0x70] sm:$0xff]
      %v194 = vld [vmem:[#allocation6 + $0x78] sm:$0xff]
      %v195 = vld [vmem:[#allocation6 + $0x80] sm:$0xff]
      %v196 = vld [vmem:[#allocation6 + $0x88] sm:$0xff]
      %v197 = vld [vmem:[#allocation6 + $0x90] sm:$0xff]
      %v198 = vld [vmem:[#allocation6 + $0x98] sm:$0xff]
      %v199 = vld [vmem:[#allocation6 + $0xa0] sm:$0xff]
      %v200 = vld [vmem:[#allocation6 + $0xa8] sm:$0xff]
      %v201 = vld [vmem:[#allocation6 + $0xb0] sm:$0xff]
      %v202 = vld [vmem:[#allocation6 + $0xb8] sm:$0xff]
      %v203 = vld [vmem:[#allocation6 + $0xc0] sm:$0xff]
      %v204 = vld [vmem:[#allocation6 + $0xc8] sm:$0xff]
      %v205 = vld [vmem:[#allocation6 + $0xd0] sm:$0xff]
      %v206 = vld [vmem:[#allocation6 + $0xd8] sm:$0xff]
      %v207 = vld [vmem:[#allocation6 + $0xe0] sm:$0xff]
      %v208 = vld [vmem:[#allocation6 + $0xe8] sm:$0xff]
      %v209 = vld [vmem:[#allocation6 + $0xf0] sm:$0xff]
      %v210 = vld [vmem:[#allocation6 + $0xf8] sm:$0xff]
      %v243 = vunpack.c.l.b16 %v179
      %v244 = vunpack.c.h.b16 %v179
      %v245 = vunpack.c.l.b16 %v180
      %v246 = vunpack.c.h.b16 %v180
      %v247 = vunpack.c.l.b16 %v181
      %v248 = vunpack.c.h.b16 %v181
      %v249 = vunpack.c.l.b16 %v182
      %v250 = vunpack.c.h.b16 %v182
      %v251 = vunpack.c.l.b16 %v183
      %v252 = vunpack.c.h.b16 %v183
      %v253 = vunpack.c.l.b16 %v184
      %v254 = vunpack.c.h.b16 %v184
      %v255 = vunpack.c.l.b16 %v185
      %v256 = vunpack.c.h.b16 %v185
      %v257 = vunpack.c.l.b16 %v186
      %v258 = vunpack.c.h.b16 %v186
      %v259 = vunpack.c.l.b16 %v187
      %v260 = vunpack.c.h.b16 %v187
      %v261 = vunpack.c.l.b16 %v188
      %v262 = vunpack.c.h.b16 %v188
      %v263 = vunpack.c.l.b16 %v189
      %v264 = vunpack.c.h.b16 %v189
      %v265 = vunpack.c.l.b16 %v190
      %v266 = vunpack.c.h.b16 %v190
      %v267 = vunpack.c.l.b16 %v191
      %v268 = vunpack.c.h.b16 %v191
      %v269 = vunpack.c.l.b16 %v192
      %v270 = vunpack.c.h.b16 %v192
      %v271 = vunpack.c.l.b16 %v193
      %v272 = vunpack.c.h.b16 %v193
      %v273 = vunpack.c.l.b16 %v194
      %v274 = vunpack.c.h.b16 %v194
      %v275 = vunpack.c.l.b16 %v195
      %v276 = vunpack.c.h.b16 %v195
      %v277 = vunpack.c.l.b16 %v196
      %v278 = vunpack.c.h.b16 %v196
      %v279 = vunpack.c.l.b16 %v197
      %v280 = vunpack.c.h.b16 %v197
      %v281 = vunpack.c.l.b16 %v198
      %v282 = vunpack.c.h.b16 %v198
      %v283 = vunpack.c.l.b16 %v199
      %v284 = vunpack.c.h.b16 %v199
      %v285 = vunpack.c.l.b16 %v200
      %v286 = vunpack.c.h.b16 %v200
      %v287 = vunpack.c.l.b16 %v201
      %v288 = vunpack.c.h.b16 %v201
      %v289 = vunpack.c.l.b16 %v202
      %v290 = vunpack.c.h.b16 %v202
      %v291 = vunpack.c.l.b16 %v203
      %v292 = vunpack.c.h.b16 %v203
      %v293 = vunpack.c.l.b16 %v204
      %v294 = vunpack.c.h.b16 %v204
      %v295 = vunpack.c.l.b16 %v205
      %v296 = vunpack.c.h.b16 %v205
      %v297 = vunpack.c.l.b16 %v206
      %v298 = vunpack.c.h.b16 %v206
      %v299 = vunpack.c.l.b16 %v207
      %v300 = vunpack.c.h.b16 %v207
      %v301 = vunpack.c.l.b16 %v208
      %v302 = vunpack.c.h.b16 %v208
      %v303 = vunpack.c.l.b16 %v209
      %v304 = vunpack.c.h.b16 %v209
      %v305 = vunpack.c.l.b16 %v210
      %v306 = vunpack.c.h.b16 %v210
      %v307 = vpack.c.b16 %v245, %v243
      %v308 = vpack.c.b16 %v246, %v244
      %v309 = vpack.c.b16 %v249, %v247
      %v310 = vpack.c.b16 %v250, %v248
      %v311 = vpack.c.b16 %v253, %v251
      %v312 = vpack.c.b16 %v254, %v252
      %v313 = vpack.c.b16 %v257, %v255
      %v314 = vpack.c.b16 %v258, %v256
      %v315 = vpack.c.b16 %v261, %v259
      %v316 = vpack.c.b16 %v262, %v260
      %v317 = vpack.c.b16 %v265, %v263
      %v318 = vpack.c.b16 %v266, %v264
      %v319 = vpack.c.b16 %v269, %v267
      %v320 = vpack.c.b16 %v270, %v268
      %v321 = vpack.c.b16 %v273, %v271
      %v322 = vpack.c.b16 %v274, %v272
      %v323 = vpack.c.b16 %v277, %v275
      %v324 = vpack.c.b16 %v278, %v276
      %v325 = vpack.c.b16 %v281, %v279
      %v326 = vpack.c.b16 %v282, %v280
      %v327 = vpack.c.b16 %v285, %v283
      %v328 = vpack.c.b16 %v286, %v284
      %v329 = vpack.c.b16 %v289, %v287
      %v330 = vpack.c.b16 %v290, %v288
      %v331 = vpack.c.b16 %v293, %v291
      %v332 = vpack.c.b16 %v294, %v292
      %v333 = vpack.c.b16 %v297, %v295
      %v334 = vpack.c.b16 %v298, %v296
      %v335 = vpack.c.b16 %v301, %v299
      %v336 = vpack.c.b16 %v302, %v300
      %v337 = vpack.c.b16 %v305, %v303
      %v338 = vpack.c.b16 %v306, %v304
      %v403 = vunpack.c.l.b16 %v115
      %v404 = vunpack.c.l.b16 %v116
      %v405 = vunpack.c.l.b16 %v117
      %v406 = vunpack.c.l.b16 %v118
      %v407 = vunpack.c.l.b16 %v119
      %v408 = vunpack.c.l.b16 %v120
      %v409 = vunpack.c.l.b16 %v121
      %v410 = vunpack.c.l.b16 %v122
      %v411 = vunpack.c.l.b16 %v123
      %v412 = vunpack.c.l.b16 %v124
      %v413 = vunpack.c.l.b16 %v125
      %v414 = vunpack.c.l.b16 %v126
      %v415 = vunpack.c.l.b16 %v127
      %v416 = vunpack.c.l.b16 %v128
      %v417 = vunpack.c.l.b16 %v129
      %v418 = vunpack.c.l.b16 %v130
      %v419 = vunpack.c.l.b16 %v131
      %v420 = vunpack.c.l.b16 %v132
      %v421 = vunpack.c.l.b16 %v133
      %v422 = vunpack.c.l.b16 %v134
      %v423 = vunpack.c.l.b16 %v135
      %v424 = vunpack.c.l.b16 %v136
      %v425 = vunpack.c.l.b16 %v137
      %v426 = vunpack.c.l.b16 %v138
      %v427 = vunpack.c.l.b16 %v139
      %v428 = vunpack.c.l.b16 %v140
      %v429 = vunpack.c.l.b16 %v141
      %v430 = vunpack.c.l.b16 %v142
      %v431 = vunpack.c.l.b16 %v143
      %v432 = vunpack.c.l.b16 %v144
      %v433 = vunpack.c.l.b16 %v145
      %v434 = vunpack.c.l.b16 %v146
      %v435 = vpack.c.b16 %v404, %v403
      %v436 = vpack.c.b16 %v406, %v405
      %v437 = vpack.c.b16 %v408, %v407
      %v438 = vpack.c.b16 %v410, %v409
      %v439 = vpack.c.b16 %v412, %v411
      %v440 = vpack.c.b16 %v414, %v413
      %v441 = vpack.c.b16 %v416, %v415
      %v442 = vpack.c.b16 %v418, %v417
      %v443 = vpack.c.b16 %v420, %v419
      %v444 = vpack.c.b16 %v422, %v421
      %v445 = vpack.c.b16 %v424, %v423
      %v446 = vpack.c.b16 %v426, %v425
      %v447 = vpack.c.b16 %v428, %v427
      %v448 = vpack.c.b16 %v430, %v429
      %v449 = vpack.c.b16 %v432, %v431
      %v450 = vpack.c.b16 %v434, %v433
      %467 = vmatprep.subr.bf16.mxu0 0
      %468 = vmatpush1.bf16.msra.mxu0 %v435
      %469 = vmatprep.subr.bf16.mxu0 0
      %470 = vmatpush1.bf16.msra.mxu0 %v436
      %471 = vmatprep.subr.bf16.mxu0 0
      %472 = vmatpush1.bf16.msra.mxu0 %v437
      %473 = vmatprep.subr.bf16.mxu0 0
      %474 = vmatpush1.bf16.msra.mxu0 %v438
      %475 = vmatprep.subr.bf16.mxu0 0
      %476 = vmatpush1.bf16.msra.mxu0 %v439
      %477 = vmatprep.subr.bf16.mxu0 0
      %478 = vmatpush1.bf16.msra.mxu0 %v440
      %479 = vmatprep.subr.bf16.mxu0 0
      %480 = vmatpush1.bf16.msra.mxu0 %v441
      %481 = vmatprep.subr.bf16.mxu0 0
      %482 = vmatpush1.bf16.msra.mxu0 %v442
      %483 = vmatprep.subr.bf16.mxu0 0
      %484 = vmatpush1.bf16.msra.mxu0 %v443
      %485 = vmatprep.subr.bf16.mxu0 0
      %486 = vmatpush1.bf16.msra.mxu0 %v444
      %487 = vmatprep.subr.bf16.mxu0 0
      %488 = vmatpush1.bf16.msra.mxu0 %v445
      %489 = vmatprep.subr.bf16.mxu0 0
      %490 = vmatpush1.bf16.msra.mxu0 %v446
      %491 = vmatprep.subr.bf16.mxu0 0
      %492 = vmatpush1.bf16.msra.mxu0 %v447
      %493 = vmatprep.subr.bf16.mxu0 0
      %494 = vmatpush1.bf16.msra.mxu0 %v448
      %495 = vmatprep.subr.bf16.mxu0 0
      %496 = vmatpush1.bf16.msra.mxu0 %v449
      %497 = vmatprep.subr.bf16.mxu0 0
      %498 = vmatpush1.bf16.msra.mxu0 %v450
      %499 = vmatprep.mubr.bf16.mxu0 %v308
      %500 = vmatmul.mubr.bf16.gmra.mrb[0].mxu0 %v307
      %v501 = vpop.f32.mrb[0].mxu0
      %v502 = vadd.f32 0.0, %v501
      %v503 = vpop.f32.mrb[0].mxu0
      %v504 = vpop.f32.mrb[0].mxu0
      %v505 = vadd.f32 0.0, %v504
      %v506 = vpop.f32.mrb[0].mxu0
      %507 = vmatprep.mubr.bf16.mxu0 %v310
      %508 = vmatmul.mubr.bf16.gmra.mrb[0].mxu0 %v309
      %v509 = vpop.f32.mrb[0].mxu0
      %v510 = vadd.f32 0.0, %v509
      %v511 = vpop.f32.mrb[0].mxu0
      %v512 = vpop.f32.mrb[0].mxu0
      %v513 = vadd.f32 0.0, %v512
      %v514 = vpop.f32.mrb[0].mxu0
      %515 = vmatprep.mubr.bf16.mxu0 %v312
      %516 = vmatmul.mubr.bf16.gmra.mrb[0].mxu0 %v311
      %v517 = vpop.f32.mrb[0].mxu0
      %v518 = vadd.f32 0.0, %v517
      %v519 = vpop.f32.mrb[0].mxu0
      %v520 = vpop.f32.mrb[0].mxu0
      %v521 = vadd.f32 0.0, %v520
      %v522 = vpop.f32.mrb[0].mxu0
      %523 = vmatprep.mubr.bf16.mxu0 %v314
      %524 = vmatmul.mubr.bf16.gmra.mrb[0].mxu0 %v313
      %v525 = vpop.f32.mrb[0].mxu0
      %v526 = vadd.f32 0.0, %v525
      %v527 = vpop.f32.mrb[0].mxu0
      %v528 = vpop.f32.mrb[0].mxu0
      %v529 = vadd.f32 0.0, %v528
      %v530 = vpop.f32.mrb[0].mxu0
      %531 = vmatprep.mubr.bf16.mxu0 %v316
      %532 = vmatmul.mubr.bf16.gmra.mrb[0].mxu0 %v315
      %v533 = vpop.f32.mrb[0].mxu0
      %v534 = vadd.f32 0.0, %v533
      %v535 = vpop.f32.mrb[0].mxu0
      %v536 = vpop.f32.mrb[0].mxu0
      %v537 = vadd.f32 0.0, %v536
      %v538 = vpop.f32.mrb[0].mxu0
      %539 = vmatprep.mubr.bf16.mxu0 %v318
      %540 = vmatmul.mubr.bf16.gmra.mrb[0].mxu0 %v317
      %v541 = vpop.f32.mrb[0].mxu0
      %v542 = vadd.f32 0.0, %v541
      %v543 = vpop.f32.mrb[0].mxu0
      %v544 = vpop.f32.mrb[0].mxu0
      %v545 = vadd.f32 0.0, %v544
      %v546 = vpop.f32.mrb[0].mxu0
      %547 = vmatprep.mubr.bf16.mxu0 %v320
      %548 = vmatmul.mubr.bf16.gmra.mrb[0].mxu0 %v319
      %v549 = vpop.f32.mrb[0].mxu0
      %v550 = vadd.f32 0.0, %v549
      %v551 = vpop.f32.mrb[0].mxu0
      %v552 = vpop.f32.mrb[0].mxu0
      %v553 = vadd.f32 0.0, %v552
      %v554 = vpop.f32.mrb[0].mxu0
      %555 = vmatprep.mubr.bf16.mxu0 %v322
      %556 = vmatmul.mubr.bf16.gmra.mrb[0].mxu0 %v321
      %v557 = vpop.f32.mrb[0].mxu0
      %v558 = vadd.f32 0.0, %v557
      %v559 = vpop.f32.mrb[0].mxu0
      %v560 = vpop.f32.mrb[0].mxu0
      %v561 = vadd.f32 0.0, %v560
      %v562 = vpop.f32.mrb[0].mxu0
      %563 = vmatprep.mubr.bf16.mxu0 %v324
      %564 = vmatmul.mubr.bf16.gmra.mrb[0].mxu0 %v323
      %v565 = vpop.f32.mrb[0].mxu0
      %v566 = vadd.f32 0.0, %v565
      %v567 = vpop.f32.mrb[0].mxu0
      %v568 = vpop.f32.mrb[0].mxu0
      %v569 = vadd.f32 0.0, %v568
      %v570 = vpop.f32.mrb[0].mxu0
      %571 = vmatprep.mubr.bf16.mxu0 %v326
      %572 = vmatmul.mubr.bf16.gmra.mrb[0].mxu0 %v325
      %v573 = vpop.f32.mrb[0].mxu0
      %v574 = vadd.f32 0.0, %v573
      %v575 = vpop.f32.mrb[0].mxu0
      %v576 = vpop.f32.mrb[0].mxu0
      %v577 = vadd.f32 0.0, %v576
      %v578 = vpop.f32.mrb[0].mxu0
      %579 = vmatprep.mubr.bf16.mxu0 %v328
      %580 = vmatmul.mubr.bf16.gmra.mrb[0].mxu0 %v327
      %v581 = vpop.f32.mrb[0].mxu0
      %v582 = vadd.f32 0.0, %v581
      %v583 = vpop.f32.mrb[0].mxu0
      %v584 = vpop.f32.mrb[0].mxu0
      %v585 = vadd.f32 0.0, %v584
      %v586 = vpop.f32.mrb[0].mxu0
      %587 = vmatprep.mubr.bf16.mxu0 %v330
      %588 = vmatmul.mubr.bf16.gmra.mrb[0].mxu0 %v329
      %v589 = vpop.f32.mrb[0].mxu0
      %v590 = vadd.f32 0.0, %v589
      %v591 = vpop.f32.mrb[0].mxu0
      %v592 = vpop.f32.mrb[0].mxu0
      %v593 = vadd.f32 0.0, %v592
      %v594 = vpop.f32.mrb[0].mxu0
      %595 = vmatprep.mubr.bf16.mxu0 %v332
      %596 = vmatmul.mubr.bf16.gmra.mrb[0].mxu0 %v331
      %v597 = vpop.f32.mrb[0].mxu0
      %v598 = vadd.f32 0.0, %v597
      %v599 = vpop.f32.mrb[0].mxu0
      %v600 = vpop.f32.mrb[0].mxu0
      %v601 = vadd.f32 0.0, %v600
      %v602 = vpop.f32.mrb[0].mxu0
      %603 = vmatprep.mubr.bf16.mxu0 %v334
      %604 = vmatmul.mubr.bf16.gmra.mrb[0].mxu0 %v333
      %v605 = vpop.f32.mrb[0].mxu0
      %v606 = vadd.f32 0.0, %v605
      %v607 = vpop.f32.mrb[0].mxu0
      %v608 = vpop.f32.mrb[0].mxu0
      %v609 = vadd.f32 0.0, %v608
      %v610 = vpop.f32.mrb[0].mxu0
      %611 = vmatprep.mubr.bf16.mxu0 %v336
      %612 = vmatmul.mubr.bf16.gmra.mrb[0].mxu0 %v335
      %v613 = vpop.f32.mrb[0].mxu0
      %v614 = vadd.f32 0.0, %v613
      %v615 = vpop.f32.mrb[0].mxu0
      %v616 = vpop.f32.mrb[0].mxu0
      %v617 = vadd.f32 0.0, %v616
      %v618 = vpop.f32.mrb[0].mxu0
      %619 = vmatprep.mubr.bf16.mxu0 %v338
      %620 = vmatmul.mubr.bf16.gmra.mrb[0].mxu0 %v337
      %v621 = vpop.f32.mrb[0].mxu0
      %v622 = vadd.f32 0.0, %v621
      %v623 = vpop.f32.mrb[0].mxu0
      %v624 = vpop.f32.mrb[0].mxu0
      %v625 = vadd.f32 0.0, %v624
      %v626 = vpop.f32.mrb[0].mxu0
      %627 = vdwg.mxu0
      %v628 = vadd.f32 %v147, %v502
      %v629 = vadd.f32 %v148, %v505
      %v630 = vadd.f32 %v149, %v510
      %v631 = vadd.f32 %v150, %v513
      %v632 = vadd.f32 %v151, %v518
      %v633 = vadd.f32 %v152, %v521
      %v634 = vadd.f32 %v153, %v526
      %v635 = vadd.f32 %v154, %v529
      %v636 = vadd.f32 %v155, %v534
      %v637 = vadd.f32 %v156, %v537
      %v638 = vadd.f32 %v157, %v542
      %v639 = vadd.f32 %v158, %v545
      %v640 = vadd.f32 %v159, %v550
      %v641 = vadd.f32 %v160, %v553
      %v642 = vadd.f32 %v161, %v558
      %v643 = vadd.f32 %v162, %v561
      %v644 = vadd.f32 %v163, %v566
      %v645 = vadd.f32 %v164, %v569
      %v646 = vadd.f32 %v165, %v574
      %v647 = vadd.f32 %v166, %v577
      %v648 = vadd.f32 %v167, %v582
      %v649 = vadd.f32 %v168, %v585
      %v650 = vadd.f32 %v169, %v590
      %v651 = vadd.f32 %v170, %v593
      %v652 = vadd.f32 %v171, %v598
      %v653 = vadd.f32 %v172, %v601
      %v654 = vadd.f32 %v173, %v606
      %v655 = vadd.f32 %v174, %v609
      %v656 = vadd.f32 %v175, %v614
      %v657 = vadd.f32 %v176, %v617
      %v658 = vadd.f32 %v177, %v622
      %v659 = vadd.f32 %v178, %v625
      %660 = vst [vmem:[#allocation2] sm:$0xff] %v628
      %661 = vst [vmem:[#allocation2 + $0x8] sm:$0xff] %v629
      %662 = vst [vmem:[#allocation2 + $0x10] sm:$0xff] %v630
      %663 = vst [vmem:[#allocation2 + $0x18] sm:$0xff] %v631
      %664 = vst [vmem:[#allocation2 + $0x20] sm:$0xff] %v632
      %665 = vst [vmem:[#allocation2 + $0x28] sm:$0xff] %v633
      %666 = vst [vmem:[#allocation2 + $0x30] sm:$0xff] %v634
      %667 = vst [vmem:[#allocation2 + $0x38] sm:$0xff] %v635
      %668 = vst [vmem:[#allocation2 + $0x40] sm:$0xff] %v636
      %669 = vst [vmem:[#allocation2 + $0x48] sm:$0xff] %v637
      %670 = vst [vmem:[#allocation2 + $0x50] sm:$0xff] %v638
      %671 = vst [vmem:[#allocation2 + $0x58] sm:$0xff] %v639
      %672 = vst [vmem:[#allocation2 + $0x60] sm:$0xff] %v640
      %673 = vst [vmem:[#allocation2 + $0x68] sm:$0xff] %v641
      %674 = vst [vmem:[#allocation2 + $0x70] sm:$0xff] %v642
      %675 = vst [vmem:[#allocation2 + $0x78] sm:$0xff] %v643
      %676 = vst [vmem:[#allocation2 + $0x80] sm:$0xff] %v644
      %677 = vst [vmem:[#allocation2 + $0x88] sm:$0xff] %v645
      %678 = vst [vmem:[#allocation2 + $0x90] sm:$0xff] %v646
      %679 = vst [vmem:[#allocation2 + $0x98] sm:$0xff] %v647
      %680 = vst [vmem:[#allocation2 + $0xa0] sm:$0xff] %v648
      %681 = vst [vmem:[#allocation2 + $0xa8] sm:$0xff] %v649
      %682 = vst [vmem:[#allocation2 + $0xb0] sm:$0xff] %v650
      %683 = vst [vmem:[#allocation2 + $0xb8] sm:$0xff] %v651
      %684 = vst [vmem:[#allocation2 + $0xc0] sm:$0xff] %v652
      %685 = vst [vmem:[#allocation2 + $0xc8] sm:$0xff] %v653
      %686 = vst [vmem:[#allocation2 + $0xd0] sm:$0xff] %v654
      %687 = vst [vmem:[#allocation2 + $0xd8] sm:$0xff] %v655
      %688 = vst [vmem:[#allocation2 + $0xe0] sm:$0xff] %v656
      %689 = vst [vmem:[#allocation2 + $0xe8] sm:$0xff] %v657
      %690 = vst [vmem:[#allocation2 + $0xf0] sm:$0xff] %v658
      %691 = vst [vmem:[#allocation2 + $0xf8] sm:$0xff] %v659
    $region29: #{tpu_custom_call.1} parent=1 // pred_fallthru
      _
    %s692 = ssub.s32 %s60, 1
    %p693 = scmp.gt.s32.totalorder %s692, 0
    %s694 = scalar_select %p693, %s692, 0
    %p695 = scmp.eq.s32.totalorder 0, %s694
    // Predicated region
    $region30: #{tpu_custom_call.1} parent=1 // pred_check
      %p696 = pneg %p695
    $region31: #{tpu_custom_call.1} parent=1 // pred_check_branch
      %698 = sbr.rel (%p696) target = $region33
    $region32: #{tpu_custom_call.1} parent=1 // pred_region
      %v699 = vld [vmem:[#allocation2] sm:$0xff]
      %v700 = vld [vmem:[#allocation2 + $0x8] sm:$0xff]
      %v701 = vld [vmem:[#allocation2 + $0x10] sm:$0xff]
      %v702 = vld [vmem:[#allocation2 + $0x18] sm:$0xff]
      %v703 = vld [vmem:[#allocation2 + $0x20] sm:$0xff]
      %v704 = vld [vmem:[#allocation2 + $0x28] sm:$0xff]
      %v705 = vld [vmem:[#allocation2 + $0x30] sm:$0xff]
      %v706 = vld [vmem:[#allocation2 + $0x38] sm:$0xff]
      %v707 = vld [vmem:[#allocation2 + $0x40] sm:$0xff]
      %v708 = vld [vmem:[#allocation2 + $0x48] sm:$0xff]
      %v709 = vld [vmem:[#allocation2 + $0x50] sm:$0xff]
      %v710 = vld [vmem:[#allocation2 + $0x58] sm:$0xff]
      %v711 = vld [vmem:[#allocation2 + $0x60] sm:$0xff]
      %v712 = vld [vmem:[#allocation2 + $0x68] sm:$0xff]
      %v713 = vld [vmem:[#allocation2 + $0x70] sm:$0xff]
      %v714 = vld [vmem:[#allocation2 + $0x78] sm:$0xff]
      %v715 = vld [vmem:[#allocation2 + $0x80] sm:$0xff]
      %v716 = vld [vmem:[#allocation2 + $0x88] sm:$0xff]
      %v717 = vld [vmem:[#allocation2 + $0x90] sm:$0xff]
      %v718 = vld [vmem:[#allocation2 + $0x98] sm:$0xff]
      %v719 = vld [vmem:[#allocation2 + $0xa0] sm:$0xff]
      %v720 = vld [vmem:[#allocation2 + $0xa8] sm:$0xff]
      %v721 = vld [vmem:[#allocation2 + $0xb0] sm:$0xff]
      %v722 = vld [vmem:[#allocation2 + $0xb8] sm:$0xff]
      %v723 = vld [vmem:[#allocation2 + $0xc0] sm:$0xff]
      %v724 = vld [vmem:[#allocation2 + $0xc8] sm:$0xff]
      %v725 = vld [vmem:[#allocation2 + $0xd0] sm:$0xff]
      %v726 = vld [vmem:[#allocation2 + $0xd8] sm:$0xff]
      %v727 = vld [vmem:[#allocation2 + $0xe0] sm:$0xff]
      %v728 = vld [vmem:[#allocation2 + $0xe8] sm:$0xff]
      %v729 = vld [vmem:[#allocation2 + $0xf0] sm:$0xff]
      %v730 = vld [vmem:[#allocation2 + $0xf8] sm:$0xff]
      %731 = vst [vmem:[#allocation11] sm:$0xff] %v699
      %732 = vst [vmem:[#allocation11 + $0x8] sm:$0xff] %v700
      %733 = vst [vmem:[#allocation11 + $0x10] sm:$0xff] %v701
      %734 = vst [vmem:[#allocation11 + $0x18] sm:$0xff] %v702
      %735 = vst [vmem:[#allocation11 + $0x20] sm:$0xff] %v703
      %736 = vst [vmem:[#allocation11 + $0x28] sm:$0xff] %v704
      %737 = vst [vmem:[#allocation11 + $0x30] sm:$0xff] %v705
      %738 = vst [vmem:[#allocation11 + $0x38] sm:$0xff] %v706
      %739 = vst [vmem:[#allocation11 + $0x40] sm:$0xff] %v707
      %740 = vst [vmem:[#allocation11 + $0x48] sm:$0xff] %v708
      %741 = vst [vmem:[#allocation11 + $0x50] sm:$0xff] %v709
      %742 = vst [vmem:[#allocation11 + $0x58] sm:$0xff] %v710
      %743 = vst [vmem:[#allocation11 + $0x60] sm:$0xff] %v711
      %744 = vst [vmem:[#allocation11 + $0x68] sm:$0xff] %v712
      %745 = vst [vmem:[#allocation11 + $0x70] sm:$0xff] %v713
      %746 = vst [vmem:[#allocation11 + $0x78] sm:$0xff] %v714
      %747 = vst [vmem:[#allocation11 + $0x80] sm:$0xff] %v715
      %748 = vst [vmem:[#allocation11 + $0x88] sm:$0xff] %v716
      %749 = vst [vmem:[#allocation11 + $0x90] sm:$0xff] %v717
      %750 = vst [vmem:[#allocation11 + $0x98] sm:$0xff] %v718
      %751 = vst [vmem:[#allocation11 + $0xa0] sm:$0xff] %v719
      %752 = vst [vmem:[#allocation11 + $0xa8] sm:$0xff] %v720
      %753 = vst [vmem:[#allocation11 + $0xb0] sm:$0xff] %v721
      %754 = vst [vmem:[#allocation11 + $0xb8] sm:$0xff] %v722
      %755 = vst [vmem:[#allocation11 + $0xc0] sm:$0xff] %v723
      %756 = vst [vmem:[#allocation11 + $0xc8] sm:$0xff] %v724
      %757 = vst [vmem:[#allocation11 + $0xd0] sm:$0xff] %v725
      %758 = vst [vmem:[#allocation11 + $0xd8] sm:$0xff] %v726
      %759 = vst [vmem:[#allocation11 + $0xe0] sm:$0xff] %v727
      %760 = vst [vmem:[#allocation11 + $0xe8] sm:$0xff] %v728
      %761 = vst [vmem:[#allocation11 + $0xf0] sm:$0xff] %v729
      %762 = vst [vmem:[#allocation11 + $0xf8] sm:$0xff] %v730
    $region33: #{tpu_custom_call.1} parent=1 // pred_fallthru
      _
    // Predicated region
    $region34: #{tpu_custom_call.1} parent=1 // pred_check
      _
    $region35: #{tpu_custom_call.1} parent=1 // pred_check_branch
      %764 = sbr.rel (0) target = $region37
    $region36: #{tpu_custom_call.1} parent=1 // pred_region
      %s766 = ssub.s32 4096, 4096
      %767 = vsyncadd [#allocation8], %s766
      %s768 = sshll.u32 [#allocation11], 4
      %s769 = int_to_ptr.vmem [resolvable:$true] %s768
      %774 = dma.vmem_to_hbm [thread:$0]  %s769, 4096, %s5, [#allocation8], 128, 128, 8
    $region37: #{tpu_custom_call.1} parent=1 // pred_fallthru
      _
    // Predicated region
    $region38: #{tpu_custom_call.1} parent=1 // pred_check
      _
    $region39: #{tpu_custom_call.1} parent=1 // pred_check_branch
      %776 = sbr.rel (0) target = $region41
    $region40: #{tpu_custom_call.1} parent=1 // pred_region
      %777 = dma.done [#allocation8], 4096
    $region41: #{tpu_custom_call.1} parent=1 // pred_fallthru
      _
    %778 = vsyncpa [#allocation7], 1
    %779 = vsyncpa [#allocation10], 1
    %780 = vsyncpa [#allocation8], 1

</llo_original>
